<compile_context>
chip_gen: v6e
topology: v6e:2x2x1
jax: 0.10.0
libtpu: 0.0.40
codegen_flags: <defaults>
</compile_context>

<pallas_src>
import functools
import math

import jax
import jax.numpy as jnp
from jax.experimental import pallas as pl
from jax.experimental.pallas import tpu as pltpu


# --------------------------- small helpers ----------------------------------

def _round_up(x, m):
    return ((x + m - 1) // m) * m


def _pad_cast(a, rows, cols, dtype):
    """Zero-pad `a` to (rows, cols) and cast to `dtype`; no-op passes skipped."""
    if a.dtype != dtype:
        a = a.astype(dtype)                      # cast first -> pad fewer bytes
    pr, pc = rows - a.shape[0], cols - a.shape[1]
    if pr or pc:
        a = jnp.pad(a, ((0, pr), (0, pc)))
    return a


def _vmem_budget_bytes():
    """Generation-aware VMEM budget (v5e/v6e: 128 MiB, v7x: 64 MiB)."""
    try:
        cap = pltpu.get_tpu_info().vmem_capacity_bytes
    except Exception:
        cap = 64 * 1024 * 1024                   # conservative (v7x-sized)
    return min(int(cap * 0.6), 80 * 1024 * 1024)


# --------------------------- kernels -----------------------------------------

def _xw_kernel(x_ref, w_ref, s_ref):
    """support = X @ W, row-tiled; computed exactly once (not per adj tile)."""
    s_ref[...] = jnp.dot(
        x_ref[...], w_ref[...], preferred_element_type=jnp.float32
    ).astype(s_ref.dtype)


def _premul_resident_kernel(*refs, has_bias, tk):
    """out = adj @ support (+ bias); support fully VMEM-resident, sliced per k.
    The f32 output block is the accumulator (its index is constant over k)."""
    if has_bias:
        adj_ref, s_ref, b_ref, o_ref = refs
    else:
        adj_ref, s_ref, o_ref = refs
    k = pl.program_id(1)

    @pl.when(k == 0)
    def _init():
        if has_bias:
            o_ref[...] = jnp.broadcast_to(b_ref[...], o_ref.shape).astype(o_ref.dtype)
        else:
            o_ref[...] = jnp.zeros_like(o_ref)

    row = pl.multiple_of(k * tk, tk)
    s_chunk = s_ref[pl.ds(row, tk), :]
    o_ref[...] += jnp.dot(adj_ref[...], s_chunk,
                          preferred_element_type=jnp.float32)


def _premul_stream_kernel(*refs, has_bias):
    """out[:, j] = adj @ support[:, j] (+ bias[j]); F_out column-tiled."""
    if has_bias:
        adj_ref, s_ref, b_ref, o_ref = refs
    else:
        adj_ref, s_ref, o_ref = refs
    k = pl.program_id(2)

    @pl.when(k == 0)
    def _init():
        if has_bias:
            o_ref[...] = jnp.broadcast_to(b_ref[...], o_ref.shape).astype(o_ref.dtype)
        else:
            o_ref[...] = jnp.zeros_like(o_ref)

    o_ref[...] += jnp.dot(adj_ref[...], s_ref[...],
                          preferred_element_type=jnp.float32)


def _postmul_kernel(*refs, has_bias):
    """out = (adj @ X) @ W (+ bias); the small W-multiply lives in the finalize."""
    if has_bias:
        adj_ref, x_ref, w_ref, b_ref, o_ref, acc_ref = refs
    else:
        adj_ref, x_ref, w_ref, o_ref, acc_ref = refs
    k = pl.program_id(1)

    @pl.when(k == 0)
    def _init():
        acc_ref[...] = jnp.zeros_like(acc_ref)

    acc_ref[...] += jnp.dot(adj_ref[...], x_ref[...],
                            preferred_element_type=jnp.float32)

    @pl.when(k == pl.num_programs(1) - 1)
    def _finalize():
        out = jnp.dot(acc_ref[...], w_ref[...],
                      preferred_element_type=jnp.float32)
        if has_bias:
            out = out + b_ref[...]
        o_ref[...] = out.astype(o_ref.dtype)


# --------------------------- wrapper ------------------------------------------

@functools.partial(
    jax.jit,
    static_argnames=("tm", "tk", "use_bf16_matmul", "force_stream_support"))
def simple_gcn_layer_forward(x, adj, weight, bias=None, *,
                             tm=512, tk=512,
                             use_bf16_matmul=True,
                             force_stream_support=False):
    """Pallas TPU implementation of simple_gcn_layer.forward.

    x:      (N, F_in)  float32
    adj:    (N, N)     float32 (typically {0,1})
    weight: (F_in, F_out) float32
    bias:   (1, 1, F_out) or None
    returns (N, F_out) in x.dtype

    With use_bf16_matmul=True (default) the O(N^2) matmul operands (adj and
    the streamed support/X) are bf16; accumulation stays f32.  Results then
    match the f32 reference to ~1e-3 relative.
    """
    n, f_in = x.shape
    assert adj.shape == (n, n)
    assert weight.shape[0] == f_in
    f_out = weight.shape[1]
    out_dtype = x.dtype
    has_bias = bias is not None

    big_dtype = jnp.bfloat16 if use_bf16_matmul else jnp.float32
    bb = jnp.dtype(big_dtype).itemsize

    # ---- lane-dense / tile-aligned sizes ------------------------------------
    f_in_pad = _round_up(f_in, 128)
    f_out_pad = _round_up(f_out, 128)
    n_pad0 = _round_up(n, 128)

    tm = min(_round_up(tm, 128), n_pad0)
    tk = min(_round_up(tk, 128), n_pad0)
    # >= 2 row tiles when possible so v7x's 2 TensorCores both get work
    # on the "parallel" row axis (costs nothing on single-TC v5e/v6e).
    if n_pad0 >= 256 and -(-n_pad0 // tm) < 2:
        tm = _round_up(n_pad0 // 2, 128)

    budget = _vmem_budget_bytes()
    premul = f_out <= f_in          # cheaper association chosen statically

    # Shared (small) operands.
    w_p = _pad_cast(weight, f_in_pad, f_out_pad, jnp.float32)
    b_p = (_pad_cast(bias.reshape(1, f_out), 1, f_out_pad, jnp.float32)
           if has_bias else None)

    if premul:
        # ---------------- adj @ (X @ W) --------------------------------------
        # Largest F_out column tile <= 512 that divides f_out_pad (streamed path).
        tn = max(d for d in (128, 256, 384, 512)
                 if d <= f_out_pad and f_out_pad % d == 0)

        def stream_fp(tm_, tk_, tn_):       # conservative, double-buffered
            return (2 * tm_ * tk_ * bb + 2 * tk_ * tn_ * bb
                    + 2 * tm_ * tn_ * 4 + 2 * tn_ * 4)

        while stream_fp(tm, tk, tn) > budget:
            if tk > 128:
                tk -= 128
            elif tn > 128 and any(f_out_pad % d == 0 for d in range(128, tn, 128)):
                tn = max(d for d in range(128, tn, 128) if f_out_pad % d == 0)
            elif tm > 128:
                tm -= 128
            else:
                break

        n_pad_m = _round_up(n, tm)
        n_pad_k = _round_up(n, tk)

        x_p = _pad_cast(x, n_pad_k, f_in_pad, jnp.float32)
        adj_p = _pad_cast(adj, n_pad_m, n_pad_k, big_dtype)

        # support = X @ W, computed exactly once (f32 accumulate, stored big_dtype).
        support = pl.pallas_call(
            _xw_kernel,
            out_shape=jax.ShapeDtypeStruct((n_pad_k, f_out_pad), big_dtype),
            grid_spec=pltpu.PrefetchScalarGridSpec(
                num_scalar_prefetch=0,
                grid=(n_pad_k // tk,),
                in_specs=[
                    pl.BlockSpec((tk, f_in_pad), lambda i: (i, 0)),
                    pl.BlockSpec((f_in_pad, f_out_pad), lambda i: (0, 0)),
                ],
                out_specs=pl.BlockSpec((tk, f_out_pad), lambda i: (i, 0)),
            ),
            compiler_params=pltpu.CompilerParams(
                dimension_semantics=("parallel",),
                vmem_limit_bytes=budget),
        )(x_p, w_p)

        # Resident-support variant: no per-row-tile re-fetch of support.
        resident_fp = (2 * tm * tk * bb + 2 * n_pad_k * f_out_pad * bb
                       + 2 * tm * f_out_pad * 4 + 2 * f_out_pad * 4)
        use_resident = (not force_stream_support) and resident_fp <= budget

        if use_resident:
            kernel = functools.partial(_premul_resident_kernel,
                                       has_bias=has_bias, tk=tk)
            in_specs = [
                pl.BlockSpec((tm, tk), lambda i, k: (i, k)),             # adj tile
                pl.BlockSpec((n_pad_k, f_out_pad), lambda i, k: (0, 0)), # support (resident)
            ]
            operands = [adj_p, support]
            if has_bias:
                in_specs.append(pl.BlockSpec((1, f_out_pad), lambda i, k: (0, 0)))
                operands.append(b_p)
            out_p = pl.pallas_call(
                kernel,
                out_shape=jax.ShapeDtypeStruct((n_pad_m, f_out_pad), jnp.float32),
                grid_spec=pltpu.PrefetchScalarGridSpec(
                    num_scalar_prefetch=0,
                    grid=(n_pad_m // tm, n_pad_k // tk),
                    in_specs=in_specs,
                    out_specs=pl.BlockSpec((tm, f_out_pad), lambda i, k: (i, 0)),
                ),
                compiler_params=pltpu.CompilerParams(
                    dimension_semantics=("parallel", "arbitrary"),
                    vmem_limit_bytes=budget),
            )(*operands)
        else:
            kernel = functools.partial(_premul_stream_kernel, has_bias=has_bias)
            in_specs = [
                pl.BlockSpec((tm, tk), lambda i, j, k: (i, k)),   # adj tile
                pl.BlockSpec((tk, tn), lambda i, j, k: (k, j)),   # support chunk
            ]
            operands = [adj_p, support]
            if has_bias:
                in_specs.append(pl.BlockSpec((1, tn), lambda i, j, k: (0, j)))
                operands.append(b_p)
            out_p = pl.pallas_call(
                kernel,
                out_shape=jax.ShapeDtypeStruct((n_pad_m, f_out_pad), jnp.float32),
                grid_spec=pltpu.PrefetchScalarGridSpec(
                    num_scalar_prefetch=0,
                    grid=(n_pad_m // tm, f_out_pad // tn, n_pad_k // tk),
                    in_specs=in_specs,
                    out_specs=pl.BlockSpec((tm, tn), lambda i, j, k: (i, j)),
                ),
                compiler_params=pltpu.CompilerParams(
                    dimension_semantics=("parallel", "parallel", "arbitrary"),
                    vmem_limit_bytes=budget),
            )(*operands)
    else:
        # ---------------- (adj @ X) @ W --------------------------------------
        # Accumulator width is f_in_pad (< f_out_pad by construction here).
        def post_fp(tm_, tk_):
            return (2 * tm_ * tk_ * bb + 2 * tk_ * f_in_pad * bb
                    + 2 * f_in_pad * f_out_pad * 4
                    + 2 * tm_ * f_out_pad * 4 + tm_ * f_in_pad * 4)

        while post_fp(tm, tk) > budget:
            if tk > 128:
                tk -= 128
            elif tm > 128:
                tm -= 128
            else:
                break

        n_pad_m = _round_up(n, tm)
        n_pad_k = _round_up(n, tk)

        x_p = _pad_cast(x, n_pad_k, f_in_pad, big_dtype)
        adj_p = _pad_cast(adj, n_pad_m, n_pad_k, big_dtype)

        kernel = functools.partial(_postmul_kernel, has_bias=has_bias)
        in_specs = [
            pl.BlockSpec((tm, tk), lambda i, k: (i, k)),              # adj tile
            pl.BlockSpec((tk, f_in_pad), lambda i, k: (k, 0)),        # X chunk
            pl.BlockSpec((f_in_pad, f_out_pad), lambda i, k: (0, 0)), # W (resident)
        ]
        operands = [adj_p, x_p, w_p]
        if has_bias:
            in_specs.append(pl.BlockSpec((1, f_out_pad), lambda i, k: (0, 0)))
            operands.append(b_p)
        out_p = pl.pallas_call(
            kernel,
            out_shape=jax.ShapeDtypeStruct((n_pad_m, f_out_pad), jnp.float32),
            grid_spec=pltpu.PrefetchScalarGridSpec(
                num_scalar_prefetch=0,
                grid=(n_pad_m // tm, n_pad_k // tk),
                in_specs=in_specs,
                out_specs=pl.BlockSpec((tm, f_out_pad), lambda i, k: (i, 0)),
                scratch_shapes=[pltpu.VMEM((tm, f_in_pad), jnp.float32)],
            ),
            compiler_params=pltpu.CompilerParams(
                dimension_semantics=("parallel", "arbitrary"),
                vmem_limit_bytes=budget),
        )(*operands)

    out = out_p[:n, :f_out]
    return out if out_dtype == jnp.float32 else out.astype(out_dtype)


# --------------------------- reference / params -------------------------------

def init_params(key, in_features, out_features, bias=False):
    """Deterministic parameter init mirroring reset_parameters()."""
    stdv = 1.0 / math.sqrt(out_features)
    kw, kb = jax.random.split(key)
    weight = jax.random.uniform(kw, (in_features, out_features),
                                dtype=jnp.float32, minval=-stdv, maxval=stdv)
    b = (jax.random.uniform(kb, (1, 1, out_features), dtype=jnp.float32,
                            minval=-stdv, maxval=stdv) if bias else None)
    return weight, b


def _ref_forward(x, adj, weight, bias=None):
    hp = jax.lax.Precision.HIGHEST
    support = jnp.dot(x, weight, precision=hp)
    out = jnp.dot(adj, support, precision=hp)
    if bias is not None:
        out = out + bias.reshape(1, -1)
    return out


if __name__ == "__main__":
    key = jax.random.PRNGKey(0)
    k_x, k_adj, k_p, k_x2, k_adj2, k_p2 = jax.random.split(key, 6)

    def make_graph(kx, ka, n, f_in):
        xx = jax.random.normal(kx, (n, f_in), dtype=jnp.float32)
        aa = (jax.random.uniform(ka, (n, n)) > 0.5).astype(jnp.float32)
        return xx, aa

    def check(out, ref, tol):
        err = float(jnp.max(jnp.abs(out - ref)))
        scale = float(jnp.max(jnp.abs(ref))) + 1e-6
        assert err <= tol * scale, (err, scale, tol)

    # ---- module-default small shapes: 16 atoms, 32 -> 64 features -----------
    n, f_in, f_out = 16, 32, 64
    x, adj = make_graph(k_x, k_adj, n, f_in)

    # bias=False (module default); F_in < F_out -> (adj @ X) @ W path
    w, _ = init_params(k_p, f_in, f_out, bias=False)
    out = jax.block_until_ready(simple_gcn_layer_forward(x, adj, w))
    ref = _ref_forward(x, adj, w)
    assert out.shape == (n, f_out) and out.dtype == x.dtype
    check(out, ref, 2e-2)                                         # bf16 default
    out32 = jax.block_until_ready(
        simple_gcn_layer_forward(x, adj, w, use_bf16_matmul=False))
    check(out32, ref, 1e-5)                                       # exact f32 path

    # bias=True variant (same postmul path)
    w_b, b_b = init_params(k_p, f_in, f_out, bias=True)
    out_b = jax.block_until_ready(simple_gcn_layer_forward(x, adj, w_b, b_b))
    check(out_b, _ref_forward(x, adj, w_b, b_b), 2e-2)

    # F_out <= F_in -> adj @ (X @ W), VMEM-resident support path
    w_s, b_s = init_params(k_p, f_in, 16, bias=True)
    ref_s = _ref_forward(x, adj, w_s, b_s)
    out_s = jax.block_until_ready(simple_gcn_layer_forward(x, adj, w_s, b_s))
    check(out_s, ref_s, 2e-2)
    out_s32 = jax.block_until_ready(
        simple_gcn_layer_forward(x, adj, w_s, b_s, use_bf16_matmul=False))
    check(out_s32, ref_s, 1e-5)

    # Multi-tile accumulation (3 row tiles x 3 k tiles) on the resident path
    n2, f_in2, f_out2 = 300, 48, 32
    x2, adj2 = make_graph(k_x2, k_adj2, n2, f_in2)
    w2, b2 = init_params(k_p2, f_in2, f_out2, bias=True)
    out2 = jax.block_until_ready(
        simple_gcn_layer_forward(x2, adj2, w2, b2, tm=128, tk=128))
    check(out2, _ref_forward(x2, adj2, w2, b2), 2e-2)

    # Streamed-support path with an F_out column grid axis (640-wide -> 5 col tiles)
    n3, f_in3, f_out3 = 300, 640, 600
    x3, adj3 = make_graph(k_x2, k_adj2, n3, f_in3)
    w3, b3 = init_params(k_p2, f_in3, f_out3, bias=True)
    out3 = jax.block_until_ready(
        simple_gcn_layer_forward(x3, adj3, w3, b3, tm=128, tk=128,
                                 force_stream_support=True))
    check(out3, _ref_forward(x3, adj3, w3, b3), 2e-2)

    print("KERNEL_OK")
</pallas_src>

<mosaic_0001>
module attributes {stable_mosaic.version = 11 : i64} {
  func.func @_postmul_kernel(%arg0: i32, %arg1: i32, %arg2: memref<128x128xbf16, #tpu.memory_space<vmem>>, %arg3: memref<128x128xbf16, #tpu.memory_space<vmem>>, %arg4: memref<128x128xf32, #tpu.memory_space<vmem>>, %arg5: memref<128x128xf32, #tpu.memory_space<vmem>>, %arg6: memref<128x128xf32, #tpu.memory_space<vmem>>) attributes {dimension_semantics = [#tpu.dimension_semantics<parallel>, #tpu.dimension_semantics<arbitrary>], iteration_bounds = array<i64: 1, 1>, scalar_prefetch = 0 : i64, scratch_operands = 1 : i64, tpu.core_type = #tpu.core_type<tc>, window_params = [{transform_indices = @transform_0, window_bounds = array<i64: 128, 128>}, {transform_indices = @transform_1, window_bounds = array<i64: 128, 128>}, {pipeline_mode = #tpu.pipeline_mode<synchronous>, transform_indices = @transform_2, window_bounds = array<i64: 128, 128>}, {transform_indices = @transform_3, window_bounds = array<i64: 128, 128>}]} {
    %c0_i32 = arith.constant 0 : i32
    %0 = arith.cmpi eq, %arg1, %c0_i32 : i32
    %1 = arith.extui %0 : i1 to i32
    %c0_i32_0 = arith.constant 0 : i32
    %2 = arith.cmpi ne, %1, %c0_i32_0 : i32
    scf.if %2 {
      %cst_10 = arith.constant 0.000000e+00 : f32
      %12 = vector.broadcast %cst_10 : f32 to vector<128x128xf32>
      %c0_11 = arith.constant 0 : index
      %c0_12 = arith.constant 0 : index
      %13 = vector.load %arg6[%c0_11, %c0_12] : memref<128x128xf32, #tpu.memory_space<vmem>>, vector<128x128xf32>
      tpu.vector_store %arg6[%c0_11, %c0_12], %12 {strides = array<i32>} : memref<128x128xf32, #tpu.memory_space<vmem>>, vector<128x128xf32>,
    } else {
    }
    %c0 = arith.constant 0 : index
    %c0_1 = arith.constant 0 : index
    %3 = vector.load %arg6[%c0, %c0_1] : memref<128x128xf32, #tpu.memory_space<vmem>>, vector<128x128xf32>
    %c0_2 = arith.constant 0 : index
    %c0_3 = arith.constant 0 : index
    %4 = vector.load %arg2[%c0_2, %c0_3] : memref<128x128xbf16, #tpu.memory_space<vmem>>, vector<128x128xbf16>
    %c0_4 = arith.constant 0 : index
    %c0_5 = arith.constant 0 : index
    %5 = vector.load %arg3[%c0_4, %c0_5] : memref<128x128xbf16, #tpu.memory_space<vmem>>, vector<128x128xbf16>
    %cst = arith.constant dense<0.000000e+00> : vector<128x128xf32>
    %6 = tpu.matmul %4, %5, %cst {dimension_numbers = #tpu.dot_dimension_numbers<[1], [0], [0], [1], [0, 0, 1, 1], [], []>} : vector<128x128xbf16>, vector<128x128xbf16>, vector<128x128xf32> -> vector<128x128xf32>
    %7 = arith.addf %3, %6 : vector<128x128xf32>
    %c0_6 = arith.constant 0 : index
    %c0_7 = arith.constant 0 : index
    %8 = vector.load %arg6[%c0_6, %c0_7] : memref<128x128xf32, #tpu.memory_space<vmem>>, vector<128x128xf32>
    tpu.vector_store %arg6[%c0_6, %c0_7], %7 {strides = array<i32>} : memref<128x128xf32, #tpu.memory_space<vmem>>, vector<128x128xf32>,
    %c0_i32_8 = arith.constant 0 : i32
    %9 = arith.cmpi eq, %arg1, %c0_i32_8 : i32
    %10 = arith.extui %9 : i1 to i32
    %c0_i32_9 = arith.constant 0 : i32
    %11 = arith.cmpi ne, %10, %c0_i32_9 : i32
    scf.if %11 {
      %c0_10 = arith.constant 0 : index
      %c0_11 = arith.constant 0 : index
      %12 = vector.load %arg6[%c0_10, %c0_11] : memref<128x128xf32, #tpu.memory_space<vmem>>, vector<128x128xf32>
      %c0_12 = arith.constant 0 : index
      %c0_13 = arith.constant 0 : index
      %13 = vector.load %arg4[%c0_12, %c0_13] : memref<128x128xf32, #tpu.memory_space<vmem>>, vector<128x128xf32>
      %cst_14 = arith.constant dense<0.000000e+00> : vector<128x128xf32>
      %14 = tpu.matmul %12, %13, %cst_14 {dimension_numbers = #tpu.dot_dimension_numbers<[1], [0], [0], [1], [0, 0, 1, 1], [], []>} : vector<128x128xf32>, vector<128x128xf32>, vector<128x128xf32> -> vector<128x128xf32>
      %c0_15 = arith.constant 0 : index
      %c0_16 = arith.constant 0 : index
      %15 = vector.load %arg5[%c0_15, %c0_16] : memref<128x128xf32, #tpu.memory_space<vmem>>, vector<128x128xf32>
      tpu.vector_store %arg5[%c0_15, %c0_16], %14 {strides = array<i32>} : memref<128x128xf32, #tpu.memory_space<vmem>>, vector<128x128xf32>,
    } else {
    }
    return
  }
  func.func @transform_0(%arg0: i32, %arg1: i32) -> (i32, i32) {
    %c0_i32 = arith.constant 0 : i32
    return %arg0, %arg1 : i32, i32
  }
  func.func @transform_1(%arg0: i32, %arg1: i32) -> (i32, i32) {
    %c0_i32 = arith.constant 0 : i32
    %c0_i32_0 = arith.constant 0 : i32
    return %arg1, %c0_i32 : i32, i32
  }
  func.func @transform_2(%arg0: i32, %arg1: i32) -> (i32, i32) {
    %c0_i32 = arith.constant 0 : i32
    %c0_i32_0 = arith.constant 0 : i32
    %c0_i32_1 = arith.constant 0 : i32
    return %c0_i32, %c0_i32_0 : i32, i32
  }
  func.func @transform_3(%arg0: i32, %arg1: i32) -> (i32, i32) {
    %c0_i32 = arith.constant 0 : i32
    %c0_i32_0 = arith.constant 0 : i32
    return %arg0, %c0_i32 : i32, i32
  }
}

</mosaic_0001>

<llo_original>
// kernel: simple_gcn_layer_forward.1
$region0: #{simple_gcn_layer_forward.1}
  #allocation0 [shape = 'u32[]', space=smem, size = 0x4, offset = 0x4, fixed_abs, tag = 'smem constant byte address 0x4 - core index']
  #allocation1 [shape = 'u32[144,128]{1,0:T(1,128)}', space=vmem, size = 0x12000, scoped, tag = 'internal scratch']
  #allocation2 [shape = 'f32[128,128]{1,0:T(8,128)}', space=vmem, size = 0x10000, scoped, tag = 'scratch operand']
  %s0 = inlined_call_operand.vmem [shape: bf16[128,128], index: 0, kind: input, shape index: {}]
  %s1 = inlined_call_operand.vmem [shape: bf16[128,128], index: 1, kind: input, shape index: {}]
  %s2 = inlined_call_operand.vmem [shape: f32[128,128], index: 2, kind: input, shape index: {}]
  %s3 = inlined_call_operand.vmem [shape: f32[128,128], index: 3, kind: output, shape index: {}]
  %s4 = sld [smem:[#allocation0]]
  $region30: #{simple_gcn_layer_forward.1} parent=0
    _
  %s6 = ssub.s32 1, %s4
  %s7 = scalar_select 0, %s6, %s4
  // Predicated region
  $region2: #{simple_gcn_layer_forward.1} parent=0 // pred_check
    _
  $region3: #{simple_gcn_layer_forward.1} parent=0 // pred_check_branch
    %9 = sbr.rel (0) target = $region5
  $region4: #{simple_gcn_layer_forward.1} parent=0 // pred_region
    _
  $region5: #{simple_gcn_layer_forward.1} parent=0 // pred_fallthru
    _
  // Predicated region
  $region6: #{simple_gcn_layer_forward.1} parent=0 // pred_check
    _
  $region7: #{simple_gcn_layer_forward.1} parent=0 // pred_check_branch
    %11 = sbr.rel (0) target = $region9
  $region8: #{simple_gcn_layer_forward.1} parent=0 // pred_region
    _
  $region9: #{simple_gcn_layer_forward.1} parent=0 // pred_fallthru
    _
  // Predicated region
  $region10: #{simple_gcn_layer_forward.1} parent=0 // pred_check
    _
  $region11: #{simple_gcn_layer_forward.1} parent=0 // pred_check_branch
    %13 = sbr.rel (0) target = $region13
  $region12: #{simple_gcn_layer_forward.1} parent=0 // pred_region
    _
  $region13: #{simple_gcn_layer_forward.1} parent=0 // pred_fallthru
    _
  %p15 = scmp.eq.s32.totalorder 0, 0
  // Predicated region
  $region14: #{simple_gcn_layer_forward.1} parent=0 // pred_check
    %p16 = pneg %p15
  $region15: #{simple_gcn_layer_forward.1} parent=0 // pred_check_branch
    %18 = sbr.rel (%p16) target = $region17
  $region16: #{simple_gcn_layer_forward.1} parent=0 // pred_region
    %19 = vst [vmem:[#allocation2] sm:$0xff] 0.0
    %20 = vst [vmem:[#allocation2 + $0x8] sm:$0xff] 0.0
    %21 = vst [vmem:[#allocation2 + $0x10] sm:$0xff] 0.0
    %22 = vst [vmem:[#allocation2 + $0x18] sm:$0xff] 0.0
    %23 = vst [vmem:[#allocation2 + $0x20] sm:$0xff] 0.0
    %24 = vst [vmem:[#allocation2 + $0x28] sm:$0xff] 0.0
    %25 = vst [vmem:[#allocation2 + $0x30] sm:$0xff] 0.0
    %26 = vst [vmem:[#allocation2 + $0x38] sm:$0xff] 0.0
    %27 = vst [vmem:[#allocation2 + $0x40] sm:$0xff] 0.0
    %28 = vst [vmem:[#allocation2 + $0x48] sm:$0xff] 0.0
    %29 = vst [vmem:[#allocation2 + $0x50] sm:$0xff] 0.0
    %30 = vst [vmem:[#allocation2 + $0x58] sm:$0xff] 0.0
    %31 = vst [vmem:[#allocation2 + $0x60] sm:$0xff] 0.0
    %32 = vst [vmem:[#allocation2 + $0x68] sm:$0xff] 0.0
    %33 = vst [vmem:[#allocation2 + $0x70] sm:$0xff] 0.0
    %34 = vst [vmem:[#allocation2 + $0x78] sm:$0xff] 0.0
  $region17: #{simple_gcn_layer_forward.1} parent=0 // pred_fallthru
    _
  %v35 = vld [vmem:[#allocation2] sm:$0xff]
  %v36 = vld [vmem:[#allocation2 + $0x8] sm:$0xff]
  %v37 = vld [vmem:[#allocation2 + $0x10] sm:$0xff]
  %v38 = vld [vmem:[#allocation2 + $0x18] sm:$0xff]
  %v39 = vld [vmem:[#allocation2 + $0x20] sm:$0xff]
  %v40 = vld [vmem:[#allocation2 + $0x28] sm:$0xff]
  %v41 = vld [vmem:[#allocation2 + $0x30] sm:$0xff]
  %v42 = vld [vmem:[#allocation2 + $0x38] sm:$0xff]
  %v43 = vld [vmem:[#allocation2 + $0x40] sm:$0xff]
  %v44 = vld [vmem:[#allocation2 + $0x48] sm:$0xff]
  %v45 = vld [vmem:[#allocation2 + $0x50] sm:$0xff]
  %v46 = vld [vmem:[#allocation2 + $0x58] sm:$0xff]
  %v47 = vld [vmem:[#allocation2 + $0x60] sm:$0xff]
  %v48 = vld [vmem:[#allocation2 + $0x68] sm:$0xff]
  %v49 = vld [vmem:[#allocation2 + $0x70] sm:$0xff]
  %v50 = vld [vmem:[#allocation2 + $0x78] sm:$0xff]
  %v51 = vld [vmem:[%s0] sm:$0xf]
  %v52 = vld [vmem:[%s0 + $0x4] sm:$0xf]
  %v53 = vld [vmem:[%s0 + $0x8] sm:$0xf]
  %v54 = vld [vmem:[%s0 + $0xc] sm:$0xf]
  %v55 = vld [vmem:[%s0 + $0x10] sm:$0xf]
  %v56 = vld [vmem:[%s0 + $0x14] sm:$0xf]
  %v57 = vld [vmem:[%s0 + $0x18] sm:$0xf]
  %v58 = vld [vmem:[%s0 + $0x1c] sm:$0xf]
  %v59 = vld [vmem:[%s0 + $0x20] sm:$0xf]
  %v60 = vld [vmem:[%s0 + $0x24] sm:$0xf]
  %v61 = vld [vmem:[%s0 + $0x28] sm:$0xf]
  %v62 = vld [vmem:[%s0 + $0x2c] sm:$0xf]
  %v63 = vld [vmem:[%s0 + $0x30] sm:$0xf]
  %v64 = vld [vmem:[%s0 + $0x34] sm:$0xf]
  %v65 = vld [vmem:[%s0 + $0x38] sm:$0xf]
  %v66 = vld [vmem:[%s0 + $0x3c] sm:$0xf]
  %v67 = vld [vmem:[%s1] sm:$0xf]
  %v68 = vld [vmem:[%s1 + $0x4] sm:$0xf]
  %v69 = vld [vmem:[%s1 + $0x8] sm:$0xf]
  %v70 = vld [vmem:[%s1 + $0xc] sm:$0xf]
  %v71 = vld [vmem:[%s1 + $0x10] sm:$0xf]
  %v72 = vld [vmem:[%s1 + $0x14] sm:$0xf]
  %v73 = vld [vmem:[%s1 + $0x18] sm:$0xf]
  %v74 = vld [vmem:[%s1 + $0x1c] sm:$0xf]
  %v75 = vld [vmem:[%s1 + $0x20] sm:$0xf]
  %v76 = vld [vmem:[%s1 + $0x24] sm:$0xf]
  %v77 = vld [vmem:[%s1 + $0x28] sm:$0xf]
  %v78 = vld [vmem:[%s1 + $0x2c] sm:$0xf]
  %v79 = vld [vmem:[%s1 + $0x30] sm:$0xf]
  %v80 = vld [vmem:[%s1 + $0x34] sm:$0xf]
  %v81 = vld [vmem:[%s1 + $0x38] sm:$0xf]
  %v82 = vld [vmem:[%s1 + $0x3c] sm:$0xf]
  %v99 = vunpack.c.l.b16 %v51
  %v100 = vunpack.c.l.b16 %v52
  %v101 = vunpack.c.l.b16 %v53
  %v102 = vunpack.c.l.b16 %v54
  %v103 = vunpack.c.l.b16 %v55
  %v104 = vunpack.c.l.b16 %v56
  %v105 = vunpack.c.l.b16 %v57
  %v106 = vunpack.c.l.b16 %v58
  %v107 = vunpack.c.l.b16 %v59
  %v108 = vunpack.c.l.b16 %v60
  %v109 = vunpack.c.l.b16 %v61
  %v110 = vunpack.c.l.b16 %v62
  %v111 = vunpack.c.l.b16 %v63
  %v112 = vunpack.c.l.b16 %v64
  %v113 = vunpack.c.l.b16 %v65
  %v114 = vunpack.c.l.b16 %v66
  %v115 = vpack.c.b16 %v100, %v99
  %v116 = vpack.c.b16 %v102, %v101
  %v117 = vpack.c.b16 %v104, %v103
  %v118 = vpack.c.b16 %v106, %v105
  %v119 = vpack.c.b16 %v108, %v107
  %v120 = vpack.c.b16 %v110, %v109
  %v121 = vpack.c.b16 %v112, %v111
  %v122 = vpack.c.b16 %v114, %v113
  %v147 = vunpack.c.l.b16 %v67
  %v148 = vunpack.c.l.b16 %v68
  %v149 = vunpack.c.l.b16 %v69
  %v150 = vunpack.c.l.b16 %v70
  %v151 = vunpack.c.l.b16 %v71
  %v152 = vunpack.c.l.b16 %v72
  %v153 = vunpack.c.l.b16 %v73
  %v154 = vunpack.c.l.b16 %v74
  %v155 = vunpack.c.l.b16 %v75
  %v156 = vunpack.c.l.b16 %v76
  %v157 = vunpack.c.l.b16 %v77
  %v158 = vunpack.c.l.b16 %v78
  %v159 = vunpack.c.l.b16 %v79
  %v160 = vunpack.c.l.b16 %v80
  %v161 = vunpack.c.l.b16 %v81
  %v162 = vunpack.c.l.b16 %v82
  %v163 = vpack.c.b16 %v148, %v147
  %v164 = vpack.c.b16 %v150, %v149
  %v165 = vpack.c.b16 %v152, %v151
  %v166 = vpack.c.b16 %v154, %v153
  %v167 = vpack.c.b16 %v156, %v155
  %v168 = vpack.c.b16 %v158, %v157
  %v169 = vpack.c.b16 %v160, %v159
  %v170 = vpack.c.b16 %v162, %v161
  %179 = vmatprep.subr.bf16.mxu0 0
  %180 = vmatpush1.bf16.msra.mxu0 %v170
  %181 = vmatprep.subr.bf16.mxu0 0
  %182 = vmatpush1.bf16.msra.mxu0 %v169
  %183 = vmatprep.subr.bf16.mxu0 0
  %184 = vmatpush1.bf16.msra.mxu0 %v168
  %185 = vmatprep.subr.bf16.mxu0 0
  %186 = vmatpush1.bf16.msra.mxu0 %v167
  %187 = vmatprep.subr.bf16.mxu0 0
  %188 = vmatpush1.bf16.msra.mxu0 %v166
  %189 = vmatprep.subr.bf16.mxu0 0
  %190 = vmatpush1.bf16.msra.mxu0 %v165
  %191 = vmatprep.subr.bf16.mxu0 0
  %192 = vmatpush1.bf16.msra.mxu0 %v164
  %193 = vmatprep.subr.bf16.mxu0 0
  %194 = vmatpush1.bf16.msra.mxu0 %v163
  %195 = vmatprep.subr.bf16.mxu0 0
  %196 = vmatpush2.bf16.msra.mxu0 0
  %197 = vmatprep.subr.bf16.mxu0 0
  %198 = vmatpush2.bf16.msra.mxu0 0
  %199 = vmatprep.subr.bf16.mxu0 0
  %200 = vmatpush2.bf16.msra.mxu0 0
  %201 = vmatprep.subr.bf16.mxu0 0
  %202 = vmatpush2.bf16.msra.mxu0 0
  %203 = vmatprep.subr.bf16.mxu0 0
  %204 = vmatpush2.bf16.msra.mxu0 0
  %205 = vmatprep.subr.bf16.mxu0 0
  %206 = vmatpush2.bf16.msra.mxu0 0
  %207 = vmatprep.subr.bf16.mxu0 0
  %208 = vmatpush2.bf16.msra.mxu0 0
  %209 = vmatprep.subr.bf16.mxu0 0
  %210 = vmatpush2.bf16.msra.mxu0 0
  %211 = vmatprep.mubr.bf16.mxu0 0
  %212 = vmatmul.mubr.bf16.gmra.mxu0 %v115
  %v213 = vpop.f32.mrf.mxu0
  %v214 = vadd.f32 0.0, %v213
  %v215 = vpop.f32.mrf.mxu0
  %v216 = vpop.f32.mrf.mxu0
  %v217 = vadd.f32 0.0, %v216
  %v218 = vpop.f32.mrf.mxu0
  %219 = vmatprep.mubr.bf16.mxu0 0
  %220 = vmatmul.mubr.bf16.gmra.mxu0 %v116
  %v221 = vpop.f32.mrf.mxu0
  %v222 = vadd.f32 0.0, %v221
  %v223 = vpop.f32.mrf.mxu0
  %v224 = vpop.f32.mrf.mxu0
  %v225 = vadd.f32 0.0, %v224
  %v226 = vpop.f32.mrf.mxu0
  %227 = vmatprep.mubr.bf16.mxu0 0
  %228 = vmatmul.mubr.bf16.gmra.mxu0 %v117
  %v229 = vpop.f32.mrf.mxu0
  %v230 = vadd.f32 0.0, %v229
  %v231 = vpop.f32.mrf.mxu0
  %v232 = vpop.f32.mrf.mxu0
  %v233 = vadd.f32 0.0, %v232
  %v234 = vpop.f32.mrf.mxu0
  %235 = vmatprep.mubr.bf16.mxu0 0
  %236 = vmatmul.mubr.bf16.gmra.mxu0 %v118
  %v237 = vpop.f32.mrf.mxu0
  %v238 = vadd.f32 0.0, %v237
  %v239 = vpop.f32.mrf.mxu0
  %v240 = vpop.f32.mrf.mxu0
  %v241 = vadd.f32 0.0, %v240
  %v242 = vpop.f32.mrf.mxu0
  %243 = vmatprep.mubr.bf16.mxu0 0
  %244 = vmatmul.mubr.bf16.gmra.mxu0 %v119
  %v245 = vpop.f32.mrf.mxu0
  %v246 = vadd.f32 0.0, %v245
  %v247 = vpop.f32.mrf.mxu0
  %v248 = vpop.f32.mrf.mxu0
  %v249 = vadd.f32 0.0, %v248
  %v250 = vpop.f32.mrf.mxu0
  %251 = vmatprep.mubr.bf16.mxu0 0
  %252 = vmatmul.mubr.bf16.gmra.mxu0 %v120
  %v253 = vpop.f32.mrf.mxu0
  %v254 = vadd.f32 0.0, %v253
  %v255 = vpop.f32.mrf.mxu0
  %v256 = vpop.f32.mrf.mxu0
  %v257 = vadd.f32 0.0, %v256
  %v258 = vpop.f32.mrf.mxu0
  %259 = vmatprep.mubr.bf16.mxu0 0
  %260 = vmatmul.mubr.bf16.gmra.mxu0 %v121
  %v261 = vpop.f32.mrf.mxu0
  %v262 = vadd.f32 0.0, %v261
  %v263 = vpop.f32.mrf.mxu0
  %v264 = vpop.f32.mrf.mxu0
  %v265 = vadd.f32 0.0, %v264
  %v266 = vpop.f32.mrf.mxu0
  %267 = vmatprep.mubr.bf16.mxu0 0
  %268 = vmatmul.mubr.bf16.gmra.mxu0 %v122
  %v269 = vpop.f32.mrf.mxu0
  %v270 = vadd.f32 0.0, %v269
  %v271 = vpop.f32.mrf.mxu0
  %v272 = vpop.f32.mrf.mxu0
  %v273 = vadd.f32 0.0, %v272
  %v274 = vpop.f32.mrf.mxu0
  %275 = vdwg.mxu0
  %v276 = vadd.f32 %v35, %v214
  %v277 = vadd.f32 %v36, %v217
  %v278 = vadd.f32 %v37, %v222
  %v279 = vadd.f32 %v38, %v225
  %v280 = vadd.f32 %v39, %v230
  %v281 = vadd.f32 %v40, %v233
  %v282 = vadd.f32 %v41, %v238
  %v283 = vadd.f32 %v42, %v241
  %v284 = vadd.f32 %v43, %v246
  %v285 = vadd.f32 %v44, %v249
  %v286 = vadd.f32 %v45, %v254
  %v287 = vadd.f32 %v46, %v257
  %v288 = vadd.f32 %v47, %v262
  %v289 = vadd.f32 %v48, %v265
  %v290 = vadd.f32 %v49, %v270
  %v291 = vadd.f32 %v50, %v273
  %292 = vst [vmem:[#allocation2] sm:$0xff] %v276
  %293 = vst [vmem:[#allocation2 + $0x8] sm:$0xff] %v277
  %294 = vst [vmem:[#allocation2 + $0x10] sm:$0xff] %v278
  %295 = vst [vmem:[#allocation2 + $0x18] sm:$0xff] %v279
  %296 = vst [vmem:[#allocation2 + $0x20] sm:$0xff] %v280
  %297 = vst [vmem:[#allocation2 + $0x28] sm:$0xff] %v281
  %298 = vst [vmem:[#allocation2 + $0x30] sm:$0xff] %v282
  %299 = vst [vmem:[#allocation2 + $0x38] sm:$0xff] %v283
  %300 = vst [vmem:[#allocation2 + $0x40] sm:$0xff] %v284
  %301 = vst [vmem:[#allocation2 + $0x48] sm:$0xff] %v285
  %302 = vst [vmem:[#allocation2 + $0x50] sm:$0xff] %v286
  %303 = vst [vmem:[#allocation2 + $0x58] sm:$0xff] %v287
  %304 = vst [vmem:[#allocation2 + $0x60] sm:$0xff] %v288
  %305 = vst [vmem:[#allocation2 + $0x68] sm:$0xff] %v289
  %306 = vst [vmem:[#allocation2 + $0x70] sm:$0xff] %v290
  %307 = vst [vmem:[#allocation2 + $0x78] sm:$0xff] %v291
  // Predicated region
  $region18: #{simple_gcn_layer_forward.1} parent=0 // pred_check
    %p308 = pneg %p15
  $region19: #{simple_gcn_layer_forward.1} parent=0 // pred_check_branch
    %310 = sbr.rel (%p308) target = $region21
  $region20: #{simple_gcn_layer_forward.1} parent=0 // pred_region
    %v311 = vld [vmem:[#allocation2] sm:$0xff]
    %v312 = vld [vmem:[#allocation2 + $0x8] sm:$0xff]
    %v313 = vld [vmem:[#allocation2 + $0x10] sm:$0xff]
    %v314 = vld [vmem:[#allocation2 + $0x18] sm:$0xff]
    %v315 = vld [vmem:[#allocation2 + $0x20] sm:$0xff]
    %v316 = vld [vmem:[#allocation2 + $0x28] sm:$0xff]
    %v317 = vld [vmem:[#allocation2 + $0x30] sm:$0xff]
    %v318 = vld [vmem:[#allocation2 + $0x38] sm:$0xff]
    %v319 = vld [vmem:[#allocation2 + $0x40] sm:$0xff]
    %v320 = vld [vmem:[#allocation2 + $0x48] sm:$0xff]
    %v321 = vld [vmem:[#allocation2 + $0x50] sm:$0xff]
    %v322 = vld [vmem:[#allocation2 + $0x58] sm:$0xff]
    %v323 = vld [vmem:[#allocation2 + $0x60] sm:$0xff]
    %v324 = vld [vmem:[#allocation2 + $0x68] sm:$0xff]
    %v325 = vld [vmem:[#allocation2 + $0x70] sm:$0xff]
    %v326 = vld [vmem:[#allocation2 + $0x78] sm:$0xff]
    %v327 = vld [vmem:[%s2] sm:$0xff]
    %v328 = vld [vmem:[%s2 + $0x8] sm:$0xff]
    %v329 = vld [vmem:[%s2 + $0x10] sm:$0xff]
    %v330 = vld [vmem:[%s2 + $0x18] sm:$0xff]
    %v331 = vld [vmem:[%s2 + $0x20] sm:$0xff]
    %v332 = vld [vmem:[%s2 + $0x28] sm:$0xff]
    %v333 = vld [vmem:[%s2 + $0x30] sm:$0xff]
    %v334 = vld [vmem:[%s2 + $0x38] sm:$0xff]
    %v335 = vld [vmem:[%s2 + $0x40] sm:$0xff]
    %v336 = vld [vmem:[%s2 + $0x48] sm:$0xff]
    %v337 = vld [vmem:[%s2 + $0x50] sm:$0xff]
    %v338 = vld [vmem:[%s2 + $0x58] sm:$0xff]
    %v339 = vld [vmem:[%s2 + $0x60] sm:$0xff]
    %v340 = vld [vmem:[%s2 + $0x68] sm:$0xff]
    %v341 = vld [vmem:[%s2 + $0x70] sm:$0xff]
    %v342 = vld [vmem:[%s2 + $0x78] sm:$0xff]
    %343 = vmatprep.subr.mxu0 0.0
    %344 = vmatpush1.msra.mxu0 %v342
    %345 = vmatprep.subr.mxu0 0.0
    %346 = vmatpush1.msra.mxu0 %v341
    %347 = vmatprep.subr.mxu0 0.0
    %348 = vmatpush1.msra.mxu0 %v340
    %349 = vmatprep.subr.mxu0 0.0
    %350 = vmatpush1.msra.mxu0 %v339
    %351 = vmatprep.subr.mxu0 0.0
    %352 = vmatpush1.msra.mxu0 %v338
    %353 = vmatprep.subr.mxu0 0.0
    %354 = vmatpush1.msra.mxu0 %v337
    %355 = vmatprep.subr.mxu0 0.0
    %356 = vmatpush1.msra.mxu0 %v336
    %357 = vmatprep.subr.mxu0 0.0
    %358 = vmatpush1.msra.mxu0 %v335
    %359 = vmatprep.subr.mxu0 0.0
    %360 = vmatpush1.msra.mxu0 %v334
    %361 = vmatprep.subr.mxu0 0.0
    %362 = vmatpush1.msra.mxu0 %v333
    %363 = vmatprep.subr.mxu0 0.0
    %364 = vmatpush1.msra.mxu0 %v332
    %365 = vmatprep.subr.mxu0 0.0
    %366 = vmatpush1.msra.mxu0 %v331
    %367 = vmatprep.subr.mxu0 0.0
    %368 = vmatpush1.msra.mxu0 %v330
    %369 = vmatprep.subr.mxu0 0.0
    %370 = vmatpush1.msra.mxu0 %v329
    %371 = vmatprep.subr.mxu0 0.0
    %372 = vmatpush1.msra.mxu0 %v328
    %373 = vmatprep.subr.mxu0 0.0
    %374 = vmatpush1.msra.mxu0 %v327
    %375 = vmatprep.subr.mxu0 0.0
    %376 = vmatpush2.msra.mxu0 0.0
    %377 = vmatprep.subr.mxu0 0.0
    %378 = vmatpush2.msra.mxu0 0.0
    %379 = vmatprep.subr.mxu0 0.0
    %380 = vmatpush2.msra.mxu0 0.0
    %381 = vmatprep.subr.mxu0 0.0
    %382 = vmatpush2.msra.mxu0 0.0
    %383 = vmatprep.subr.mxu0 0.0
    %384 = vmatpush2.msra.mxu0 0.0
    %385 = vmatprep.subr.mxu0 0.0
    %386 = vmatpush2.msra.mxu0 0.0
    %387 = vmatprep.subr.mxu0 0.0
    %388 = vmatpush2.msra.mxu0 0.0
    %389 = vmatprep.subr.mxu0 0.0
    %390 = vmatpush2.msra.mxu0 0.0
    %391 = vmatprep.subr.mxu0 0.0
    %392 = vmatpush2.msra.mxu0 0.0
    %393 = vmatprep.subr.mxu0 0.0
    %394 = vmatpush2.msra.mxu0 0.0
    %395 = vmatprep.subr.mxu0 0.0
    %396 = vmatpush2.msra.mxu0 0.0
    %397 = vmatprep.subr.mxu0 0.0
    %398 = vmatpush2.msra.mxu0 0.0
    %399 = vmatprep.subr.mxu0 0.0
    %400 = vmatpush2.msra.mxu0 0.0
    %401 = vmatprep.subr.mxu0 0.0
    %402 = vmatpush2.msra.mxu0 0.0
    %403 = vmatprep.subr.mxu0 0.0
    %404 = vmatpush2.msra.mxu0 0.0
    %405 = vmatprep.subr.mxu0 0.0
    %406 = vmatpush2.msra.mxu0 0.0
    %407 = vmatprep.mubr.f32.mxu0 0.0
    %408 = vmatmul.mubr.f32.gmra.mxu0 %v311
    %v409 = vpop.f32.mrf.mxu0
    %v410 = vadd.f32 0.0, %v409
    %v411 = vpop.f32.mrf.mxu0
    %412 = vmatprep.mubr.f32.mxu0 0.0
    %413 = vmatmul.mubr.f32.gmra.mxu0 %v312
    %v414 = vpop.f32.mrf.mxu0
    %v415 = vadd.f32 0.0, %v414
    %v416 = vpop.f32.mrf.mxu0
    %417 = vmatprep.mubr.f32.mxu0 0.0
    %418 = vmatmul.mubr.f32.gmra.mxu0 %v313
    %v419 = vpop.f32.mrf.mxu0
    %v420 = vadd.f32 0.0, %v419
    %v421 = vpop.f32.mrf.mxu0
    %422 = vmatprep.mubr.f32.mxu0 0.0
    %423 = vmatmul.mubr.f32.gmra.mxu0 %v314
    %v424 = vpop.f32.mrf.mxu0
    %v425 = vadd.f32 0.0, %v424
    %v426 = vpop.f32.mrf.mxu0
    %427 = vmatprep.mubr.f32.mxu0 0.0
    %428 = vmatmul.mubr.f32.gmra.mxu0 %v315
    %v429 = vpop.f32.mrf.mxu0
    %v430 = vadd.f32 0.0, %v429
    %v431 = vpop.f32.mrf.mxu0
    %432 = vmatprep.mubr.f32.mxu0 0.0
    %433 = vmatmul.mubr.f32.gmra.mxu0 %v316
    %v434 = vpop.f32.mrf.mxu0
    %v435 = vadd.f32 0.0, %v434
    %v436 = vpop.f32.mrf.mxu0
    %437 = vmatprep.mubr.f32.mxu0 0.0
    %438 = vmatmul.mubr.f32.gmra.mxu0 %v317
    %v439 = vpop.f32.mrf.mxu0
    %v440 = vadd.f32 0.0, %v439
    %v441 = vpop.f32.mrf.mxu0
    %442 = vmatprep.mubr.f32.mxu0 0.0
    %443 = vmatmul.mubr.f32.gmra.mxu0 %v318
    %v444 = vpop.f32.mrf.mxu0
    %v445 = vadd.f32 0.0, %v444
    %v446 = vpop.f32.mrf.mxu0
    %447 = vmatprep.mubr.f32.mxu0 0.0
    %448 = vmatmul.mubr.f32.gmra.mxu0 %v319
    %v449 = vpop.f32.mrf.mxu0
    %v450 = vadd.f32 0.0, %v449
    %v451 = vpop.f32.mrf.mxu0
    %452 = vmatprep.mubr.f32.mxu0 0.0
    %453 = vmatmul.mubr.f32.gmra.mxu0 %v320
    %v454 = vpop.f32.mrf.mxu0
    %v455 = vadd.f32 0.0, %v454
    %v456 = vpop.f32.mrf.mxu0
    %457 = vmatprep.mubr.f32.mxu0 0.0
    %458 = vmatmul.mubr.f32.gmra.mxu0 %v321
    %v459 = vpop.f32.mrf.mxu0
    %v460 = vadd.f32 0.0, %v459
    %v461 = vpop.f32.mrf.mxu0
    %462 = vmatprep.mubr.f32.mxu0 0.0
    %463 = vmatmul.mubr.f32.gmra.mxu0 %v322
    %v464 = vpop.f32.mrf.mxu0
    %v465 = vadd.f32 0.0, %v464
    %v466 = vpop.f32.mrf.mxu0
    %467 = vmatprep.mubr.f32.mxu0 0.0
    %468 = vmatmul.mubr.f32.gmra.mxu0 %v323
    %v469 = vpop.f32.mrf.mxu0
    %v470 = vadd.f32 0.0, %v469
    %v471 = vpop.f32.mrf.mxu0
    %472 = vmatprep.mubr.f32.mxu0 0.0
    %473 = vmatmul.mubr.f32.gmra.mxu0 %v324
    %v474 = vpop.f32.mrf.mxu0
    %v475 = vadd.f32 0.0, %v474
    %v476 = vpop.f32.mrf.mxu0
    %477 = vmatprep.mubr.f32.mxu0 0.0
    %478 = vmatmul.mubr.f32.gmra.mxu0 %v325
    %v479 = vpop.f32.mrf.mxu0
    %v480 = vadd.f32 0.0, %v479
    %v481 = vpop.f32.mrf.mxu0
    %482 = vmatprep.mubr.f32.mxu0 0.0
    %483 = vmatmul.mubr.f32.gmra.mxu0 %v326
    %v484 = vpop.f32.mrf.mxu0
    %v485 = vadd.f32 0.0, %v484
    %v486 = vpop.f32.mrf.mxu0
    %487 = vdwg.mxu0
    %488 = vst [vmem:[%s3] sm:$0xff] %v410
    %489 = vst [vmem:[%s3 + $0x8] sm:$0xff] %v415
    %490 = vst [vmem:[%s3 + $0x10] sm:$0xff] %v420
    %491 = vst [vmem:[%s3 + $0x18] sm:$0xff] %v425
    %492 = vst [vmem:[%s3 + $0x20] sm:$0xff] %v430
    %493 = vst [vmem:[%s3 + $0x28] sm:$0xff] %v435
    %494 = vst [vmem:[%s3 + $0x30] sm:$0xff] %v440
    %495 = vst [vmem:[%s3 + $0x38] sm:$0xff] %v445
    %496 = vst [vmem:[%s3 + $0x40] sm:$0xff] %v450
    %497 = vst [vmem:[%s3 + $0x48] sm:$0xff] %v455
    %498 = vst [vmem:[%s3 + $0x50] sm:$0xff] %v460
    %499 = vst [vmem:[%s3 + $0x58] sm:$0xff] %v465
    %500 = vst [vmem:[%s3 + $0x60] sm:$0xff] %v470
    %501 = vst [vmem:[%s3 + $0x68] sm:$0xff] %v475
    %502 = vst [vmem:[%s3 + $0x70] sm:$0xff] %v480
    %503 = vst [vmem:[%s3 + $0x78] sm:$0xff] %v485
  $region21: #{simple_gcn_layer_forward.1} parent=0 // pred_fallthru
    _
  // Predicated region
  $region22: #{simple_gcn_layer_forward.1} parent=0 // pred_check
    _
  $region23: #{simple_gcn_layer_forward.1} parent=0 // pred_check_branch
    %505 = sbr.rel (0) target = $region25
  $region24: #{simple_gcn_layer_forward.1} parent=0 // pred_region
    _
  $region25: #{simple_gcn_layer_forward.1} parent=0 // pred_fallthru
    _
  // Predicated region
  $region26: #{simple_gcn_layer_forward.1} parent=0 // pred_check
    _
  $region27: #{simple_gcn_layer_forward.1} parent=0 // pred_check_branch
    %507 = sbr.rel (0) target = $region29
  $region28: #{simple_gcn_layer_forward.1} parent=0 // pred_region
    _
  $region29: #{simple_gcn_layer_forward.1} parent=0 // pred_fallthru
    _

</llo_original>
